<compile_context>
chip_gen: v7x
topology: tpu7x:2x2x1
jax: 0.10.0
libtpu: 0.0.40
codegen_flags: <defaults>
</compile_context>

<pallas_src>
import functools
import math

import jax
import jax.numpy as jnp
from jax import lax
from jax.experimental import pallas as pl
from jax.experimental.pallas import tpu as pltpu

LN_EPS = 1e-5      # nn.LayerNorm default eps
NORM_EPS = 1e-12   # torch.nn.functional.normalize default eps
_INV_SQRT2 = 0.7071067811865476


def _layernorm(x, gamma, beta):
    mu = jnp.mean(x, axis=-1, keepdims=True)
    var = jnp.mean(jnp.square(x - mu), axis=-1, keepdims=True)
    return (x - mu) * lax.rsqrt(var + LN_EPS) * gamma + beta


def _gelu_exact(x):
    return 0.5 * x * (1.0 + lax.erf(x * _INV_SQRT2))


def _slab_layout(e, hidden):
    """Row/col layout of the packed weight slab.

    Each entry: name -> (row_start, row_stop, col_width); every block starts
    at lane 0.  Returns (n_rows, lanes, layout).
    """
    layout = {}
    r = 0
    layout["wcat"] = (r, r + e, 2 * e); r += e          # [wv | W_qk]  (E, 2E)
    layout["w1"] = (r, r + e, hidden); r += e           # fc1 weight   (E, H)
    layout["w2"] = (r, r + hidden, e); r += hidden      # fc2 weight   (H, E)
    for name, width in (("bv", e), ("b1", hidden), ("b2", e),
                        ("g1", e), ("be1", e), ("g2", e), ("be2", e)):
        layout[name] = (r, r + 1, width); r += 1
    n_rows = ((r + 7) // 8) * 8
    max_w = max(2 * e, hidden, e)
    lanes = ((max_w + 127) // 128) * 128
    return n_rows, lanes, layout


def encoder_kernel(x_ref, slab_ref, o_ref, *, layout):
    """Fused Encoder block; single invocation, batch folded into matmul M."""
    m, s, e = x_ref.shape
    ms = m * s

    def blk(name):
        r0, r1, c = layout[name]
        return slab_ref[r0:r1, 0:c]

    wcat = blk("wcat")                       # (E, 2E)  [values | QK surrogate]
    w1 = blk("w1")                           # (E, H)
    w2 = blk("w2")                           # (H, E)
    bv = blk("bv")                           # (1, E)
    b1 = blk("b1")                           # (1, H)
    b2 = blk("b2")                           # (1, E)
    g1 = blk("g1")
    be1 = blk("be1")
    g2 = blk("g2")
    be2 = blk("be2")

    x3 = x_ref[...]                          # (M, S, E)
    xf = x3.reshape(ms, e)                   # leading-dim merge; layout no-op

    # ---------------- norm1 ----------------
    h = _layernorm(xf, g1, be1)              # (MS, E)

    # ---------------- SelfAttention ----------------
    # One fused matmul: columns 0:E are the value projection (nn.Linear(E,E)
    # on norm1(x), n_heads == 1), columns E:2E are the surrogate QK projection.
    combined = jnp.dot(h, wcat, preferred_element_type=jnp.float32)   # (MS, 2E)
    v = combined[:, 0:e] + bv                                         # (MS, E)

    # torch F.normalize(bat): row-wise L2 normalize of norm1(x).  Clamp the
    # *squared* norm with eps^2 (== clamp_min(||h||, eps)).  The per-row scale
    # commutes through the matmul, so (normalize(h) @ W_qk) == combined * scale.
    sumsq = jnp.sum(h * h, axis=-1, keepdims=True)
    scale = lax.rsqrt(jnp.maximum(sumsq, NORM_EPS * NORM_EPS))        # (MS, 1)
    n = h * scale                                                     # normalized rows
    q_proj = combined[:, e:2 * e] * scale                             # (MS, E)

    # TODO(synk): the EstimatorQNN (15-qubit amplitude-encode of the
    # (query, key) pair + TwoLocal + swap-test-style measurement, observable
    # I^10 X^5) has no Pallas equivalent; a trainable bilinear surrogate
    # scores[b,q,k] = normalize(x_q)^T W_qk normalize(x_k) (the swap-test
    # circuit measures an overlap of the two amplitude-encoded states)
    # replaces qnn(t).reshape(m, s, s) while preserving shapes and dataflow.
    scores = jnp.einsum('bqd,bkd->bqk',
                        q_proj.reshape(m, s, e), n.reshape(m, s, e),
                        preferred_element_type=jnp.float32)           # (M, S, S)

    # softmax over keys (last axis); reciprocal goes to the EUP slot.
    scores = scores - jnp.max(scores, axis=-1, keepdims=True)
    p = jnp.exp(scores)
    attn = p * pl.reciprocal(jnp.sum(p, axis=-1, keepdims=True), approx=True)

    att_out = jnp.einsum('bqk,bkd->bqd', attn, v.reshape(m, s, e),
                         preferred_element_type=jnp.float32)          # (M, S, E)

    # residual 1
    x1 = xf + att_out.reshape(ms, e)                                  # (MS, E)

    # ---------------- norm2 + MLP ----------------
    h2 = _layernorm(x1, g2, be2)
    ff = jnp.dot(h2, w1, preferred_element_type=jnp.float32) + b1
    ff = _gelu_exact(ff)
    ff = jnp.dot(ff, w2, preferred_element_type=jnp.float32) + b2

    # residual 2
    o_ref[...] = (x1 + ff).reshape(m, s, e)


def encoder_forward(x, slab, layout):
    m, s, e = x.shape
    hidden = layout["b1"][2]
    ms = m * s

    # Advisory cost hint for the XLA scheduler.
    flops = 2 * ms * e * (2 * e + 2 * hidden) + 4 * m * s * s * e
    transcendentals = ms * (s + hidden)
    bytes_accessed = 4 * (x.size + slab.size + m * s * e)

    vmem = lambda: pl.BlockSpec(memory_space=pltpu.MemorySpace.VMEM)

    kernel = functools.partial(encoder_kernel, layout=layout)
    return pl.pallas_call(
        kernel,
        out_shape=jax.ShapeDtypeStruct((m, s, e), jnp.float32),
        in_specs=[vmem(), vmem()],
        out_specs=vmem(),
        cost_estimate=pl.CostEstimate(
            flops=flops,
            transcendentals=transcendentals,
            bytes_accessed=bytes_accessed),
    )(x, slab)


def init_params(key, embed_dim, forward_mul):
    e = embed_dim
    hidden = e * forward_mul
    ks = jax.random.split(key, 7)
    inv_e = 1.0 / math.sqrt(e)
    inv_h = 1.0 / math.sqrt(hidden)

    # values nn.Linear(e, e) stored as (in, out)
    wv = jax.random.normal(ks[0], (e, e), jnp.float32) * inv_e
    bv = jax.random.normal(ks[1], (1, e), jnp.float32) * inv_e
    # surrogate QNN bilinear score weight (see TODO in the kernel)
    wqk = jax.random.normal(ks[2], (e, e), jnp.float32) * inv_e
    # fc1 / fc2 stored as (in, out)
    w1 = jax.random.normal(ks[3], (e, hidden), jnp.float32) * inv_e
    b1 = jax.random.normal(ks[4], (1, hidden), jnp.float32) * inv_e
    w2 = jax.random.normal(ks[5], (hidden, e), jnp.float32) * inv_h
    b2 = jax.random.normal(ks[6], (1, e), jnp.float32) * inv_h
    # LayerNorm affine params (PyTorch init: gamma=1, beta=0)
    g1 = jnp.ones((1, e), jnp.float32)
    be1 = jnp.zeros((1, e), jnp.float32)
    g2 = jnp.ones((1, e), jnp.float32)
    be2 = jnp.zeros((1, e), jnp.float32)

    # Pack everything into one sublane-stacked, lane-padded slab -> one DMA.
    n_rows, lanes, layout = _slab_layout(e, hidden)
    slab = jnp.zeros((n_rows, lanes), jnp.float32)

    def put(buf, name, val):
        r0, r1, c = layout[name]
        return buf.at[r0:r1, 0:c].set(val)

    slab = put(slab, "wcat", jnp.concatenate([wv, wqk], axis=1))
    slab = put(slab, "w1", w1)
    slab = put(slab, "w2", w2)
    slab = put(slab, "bv", bv)
    slab = put(slab, "b1", b1)
    slab = put(slab, "b2", b2)
    slab = put(slab, "g1", g1)
    slab = put(slab, "be1", be1)
    slab = put(slab, "g2", g2)
    slab = put(slab, "be2", be2)

    return slab, layout


if __name__ == "__main__":
    # Shapes consistent with the module: embed_dim = 2**5 = 32 (forced by
    # RawFeatureVector(2**5)), n_attention_heads = 1, forward_mul = 2.
    M, S, E = 2, 8, 32
    FORWARD_MUL = 2

    key = jax.random.PRNGKey(0)
    kx, kp = jax.random.split(key)
    x = jax.random.normal(kx, (M, S, E), jnp.float32)
    slab, layout = init_params(kp, E, FORWARD_MUL)

    out = encoder_forward(x, slab, layout)
    out = jax.block_until_ready(out)
    assert out.shape == (M, S, E) and out.dtype == jnp.float32
    assert bool(jnp.all(jnp.isfinite(out)))
    print("KERNEL_OK")
</pallas_src>

<mosaic_0001>
module attributes {stable_mosaic.version = 11 : i64} {
  func.func @encoder_kernel(%arg0: memref<2x8x32xf32, #tpu.memory_space<vmem>>, %arg1: memref<136x128xf32, #tpu.memory_space<vmem>>, %arg2: memref<2x8x32xf32, #tpu.memory_space<vmem>>) attributes {dimension_semantics = [], scalar_prefetch = 0 : i64, scratch_operands = 0 : i64, tpu.core_type = #tpu.core_type<tc>} {
    %c0 = arith.constant 0 : index
    %c0_0 = arith.constant 0 : index
    %0 = vector.load %arg1[%c0, %c0_0] : memref<136x128xf32, #tpu.memory_space<vmem>>, vector<32x64xf32>
    %c32 = arith.constant 32 : index
    %c0_1 = arith.constant 0 : index
    %1 = vector.load %arg1[%c32, %c0_1] : memref<136x128xf32, #tpu.memory_space<vmem>>, vector<32x64xf32>
    %c64 = arith.constant 64 : index
    %c0_2 = arith.constant 0 : index
    %2 = vector.load %arg1[%c64, %c0_2] : memref<136x128xf32, #tpu.memory_space<vmem>>, vector<64x32xf32>
    %c128 = arith.constant 128 : index
    %c0_3 = arith.constant 0 : index
    %3 = vector.load %arg1[%c128, %c0_3] : memref<136x128xf32, #tpu.memory_space<vmem>>, vector<1x32xf32>
    %c129 = arith.constant 129 : index
    %c0_4 = arith.constant 0 : index
    %4 = vector.load %arg1[%c129, %c0_4] : memref<136x128xf32, #tpu.memory_space<vmem>>, vector<1x64xf32>
    %c130 = arith.constant 130 : index
    %c0_5 = arith.constant 0 : index
    %5 = vector.load %arg1[%c130, %c0_5] : memref<136x128xf32, #tpu.memory_space<vmem>>, vector<1x32xf32>
    %c131 = arith.constant 131 : index
    %c0_6 = arith.constant 0 : index
    %6 = vector.load %arg1[%c131, %c0_6] : memref<136x128xf32, #tpu.memory_space<vmem>>, vector<1x32xf32>
    %c132 = arith.constant 132 : index
    %c0_7 = arith.constant 0 : index
    %7 = vector.load %arg1[%c132, %c0_7] : memref<136x128xf32, #tpu.memory_space<vmem>>, vector<1x32xf32>
    %c133 = arith.constant 133 : index
    %c0_8 = arith.constant 0 : index
    %8 = vector.load %arg1[%c133, %c0_8] : memref<136x128xf32, #tpu.memory_space<vmem>>, vector<1x32xf32>
    %c134 = arith.constant 134 : index
    %c0_9 = arith.constant 0 : index
    %9 = vector.load %arg1[%c134, %c0_9] : memref<136x128xf32, #tpu.memory_space<vmem>>, vector<1x32xf32>
    %c0_10 = arith.constant 0 : index
    %c0_11 = arith.constant 0 : index
    %c0_12 = arith.constant 0 : index
    %10 = vector.load %arg0[%c0_10, %c0_11, %c0_12] : memref<2x8x32xf32, #tpu.memory_space<vmem>>, vector<2x8x32xf32>
    %11 = vector.shape_cast %10 : vector<2x8x32xf32> to vector<16x32xf32>
    %cst = arith.constant dense<0.000000e+00> : vector<16xf32>
    %12 = vector.multi_reduction <add>, %11, %cst [1] : vector<16x32xf32> to vector<16xf32>
    %13 = vector.shape_cast %12 : vector<16xf32> to vector<16x1xf32>
    %cst_13 = arith.constant 3.200000e+01 : f32
    %14 = vector.broadcast %cst_13 : f32 to vector<16x1xf32>
    %15 = arith.divf %13, %14 : vector<16x1xf32>
    %16 = vector.broadcast %15 : vector<16x1xf32> to vector<16x32xf32>
    %17 = arith.subf %11, %16 : vector<16x32xf32>
    %18 = arith.mulf %17, %17 : vector<16x32xf32>
    %cst_14 = arith.constant dense<0.000000e+00> : vector<16xf32>
    %19 = vector.multi_reduction <add>, %18, %cst_14 [1] : vector<16x32xf32> to vector<16xf32>
    %20 = vector.shape_cast %19 : vector<16xf32> to vector<16x1xf32>
    %cst_15 = arith.constant 3.200000e+01 : f32
    %21 = vector.broadcast %cst_15 : f32 to vector<16x1xf32>
    %22 = arith.divf %20, %21 : vector<16x1xf32>
    %23 = vector.broadcast %15 : vector<16x1xf32> to vector<16x32xf32>
    %24 = arith.subf %11, %23 : vector<16x32xf32>
    %cst_16 = arith.constant 9.99999974E-6 : f32
    %25 = vector.broadcast %cst_16 : f32 to vector<16x1xf32>
    %26 = arith.addf %22, %25 : vector<16x1xf32>
    %27 = math.rsqrt %26 : vector<16x1xf32>
    %28 = vector.broadcast %27 : vector<16x1xf32> to vector<16x32xf32>
    %29 = arith.mulf %24, %28 : vector<16x32xf32>
    %30 = vector.broadcast %6 : vector<1x32xf32> to vector<16x32xf32>
    %31 = arith.mulf %29, %30 : vector<16x32xf32>
    %32 = vector.broadcast %7 : vector<1x32xf32> to vector<16x32xf32>
    %33 = arith.addf %31, %32 : vector<16x32xf32>
    %cst_17 = arith.constant dense<0.000000e+00> : vector<16x64xf32>
    %34 = tpu.matmul %33, %0, %cst_17 {dimension_numbers = #tpu.dot_dimension_numbers<[1], [0], [0], [1], [0, 0, 1, 1], [], []>} : vector<16x32xf32>, vector<32x64xf32>, vector<16x64xf32> -> vector<16x64xf32>
    %35 = vector.extract_strided_slice %34 {offsets = [0, 0], sizes = [16, 32], strides = [1, 1]} : vector<16x64xf32> to vector<16x32xf32>
    %36 = vector.broadcast %3 : vector<1x32xf32> to vector<16x32xf32>
    %37 = arith.addf %35, %36 : vector<16x32xf32>
    %38 = arith.mulf %33, %33 : vector<16x32xf32>
    %cst_18 = arith.constant dense<0.000000e+00> : vector<16xf32>
    %39 = vector.multi_reduction <add>, %38, %cst_18 [1] : vector<16x32xf32> to vector<16xf32>
    %40 = vector.shape_cast %39 : vector<16xf32> to vector<16x1xf32>
    %cst_19 = arith.constant 1.000000e-24 : f32
    %41 = vector.broadcast %cst_19 : f32 to vector<16x1xf32>
    %42 = arith.maximumf %40, %41 : vector<16x1xf32>
    %43 = math.rsqrt %42 : vector<16x1xf32>
    %44 = vector.broadcast %43 : vector<16x1xf32> to vector<16x32xf32>
    %45 = arith.mulf %33, %44 : vector<16x32xf32>
    %46 = vector.extract_strided_slice %34 {offsets = [0, 32], sizes = [16, 32], strides = [1, 1]} : vector<16x64xf32> to vector<16x32xf32>
    %47 = vector.broadcast %43 : vector<16x1xf32> to vector<16x32xf32>
    %48 = arith.mulf %46, %47 : vector<16x32xf32>
    %49 = vector.shape_cast %48 : vector<16x32xf32> to vector<2x8x32xf32>
    %50 = vector.shape_cast %45 : vector<16x32xf32> to vector<2x8x32xf32>
    "tpu.trace_start"() <{level = 10 : i32, message = "bqd,bkd->bqk"}> : () -> ()
    %cst_20 = arith.constant dense<0.000000e+00> : vector<2x8x8xf32>
    %51 = tpu.matmul %49, %50, %cst_20 {dimension_numbers = #tpu.dot_dimension_numbers<[2], [2], [1], [1], [0, 0, 0, 1, 1, 1], [0], [0]>} : vector<2x8x32xf32>, vector<2x8x32xf32>, vector<2x8x8xf32> -> vector<2x8x8xf32>
    "tpu.trace_stop"() : () -> ()
    %cst_21 = arith.constant dense<0xFF800000> : vector<2x8xf32>
    %52 = vector.multi_reduction <maximumf>, %51, %cst_21 [2] : vector<2x8x8xf32> to vector<2x8xf32>
    %53 = vector.shape_cast %52 : vector<2x8xf32> to vector<2x8x1xf32>
    %54 = vector.broadcast %53 : vector<2x8x1xf32> to vector<2x8x8xf32>
    %55 = arith.subf %51, %54 : vector<2x8x8xf32>
    %56 = math.exp %55 : vector<2x8x8xf32>
    %cst_22 = arith.constant dense<0.000000e+00> : vector<2x8xf32>
    %57 = vector.multi_reduction <add>, %56, %cst_22 [2] : vector<2x8x8xf32> to vector<2x8xf32>
    %58 = vector.shape_cast %57 : vector<2x8xf32> to vector<2x8x1xf32>
    %59 = tpu.reciprocal %58 {approx = true} : vector<2x8x1xf32> -> vector<2x8x1xf32>
    %60 = vector.broadcast %59 : vector<2x8x1xf32> to vector<2x8x8xf32>
    %61 = arith.mulf %56, %60 : vector<2x8x8xf32>
    %62 = vector.shape_cast %37 : vector<16x32xf32> to vector<2x8x32xf32>
    "tpu.trace_start"() <{level = 10 : i32, message = "bqk,bkd->bqd"}> : () -> ()
    %cst_23 = arith.constant dense<0.000000e+00> : vector<2x8x32xf32>
    %63 = tpu.matmul %61, %62, %cst_23 {dimension_numbers = #tpu.dot_dimension_numbers<[2], [1], [1], [2], [0, 0, 0, 1, 1, 2], [0], [0]>} : vector<2x8x8xf32>, vector<2x8x32xf32>, vector<2x8x32xf32> -> vector<2x8x32xf32>
    "tpu.trace_stop"() : () -> ()
    %64 = vector.shape_cast %63 : vector<2x8x32xf32> to vector<16x32xf32>
    %65 = arith.addf %11, %64 : vector<16x32xf32>
    %cst_24 = arith.constant dense<0.000000e+00> : vector<16xf32>
    %66 = vector.multi_reduction <add>, %65, %cst_24 [1] : vector<16x32xf32> to vector<16xf32>
    %67 = vector.shape_cast %66 : vector<16xf32> to vector<16x1xf32>
    %cst_25 = arith.constant 3.200000e+01 : f32
    %68 = vector.broadcast %cst_25 : f32 to vector<16x1xf32>
    %69 = arith.divf %67, %68 : vector<16x1xf32>
    %70 = vector.broadcast %69 : vector<16x1xf32> to vector<16x32xf32>
    %71 = arith.subf %65, %70 : vector<16x32xf32>
    %72 = arith.mulf %71, %71 : vector<16x32xf32>
    %cst_26 = arith.constant dense<0.000000e+00> : vector<16xf32>
    %73 = vector.multi_reduction <add>, %72, %cst_26 [1] : vector<16x32xf32> to vector<16xf32>
    %74 = vector.shape_cast %73 : vector<16xf32> to vector<16x1xf32>
    %cst_27 = arith.constant 3.200000e+01 : f32
    %75 = vector.broadcast %cst_27 : f32 to vector<16x1xf32>
    %76 = arith.divf %74, %75 : vector<16x1xf32>
    %77 = vector.broadcast %69 : vector<16x1xf32> to vector<16x32xf32>
    %78 = arith.subf %65, %77 : vector<16x32xf32>
    %cst_28 = arith.constant 9.99999974E-6 : f32
    %79 = vector.broadcast %cst_28 : f32 to vector<16x1xf32>
    %80 = arith.addf %76, %79 : vector<16x1xf32>
    %81 = math.rsqrt %80 : vector<16x1xf32>
    %82 = vector.broadcast %81 : vector<16x1xf32> to vector<16x32xf32>
    %83 = arith.mulf %78, %82 : vector<16x32xf32>
    %84 = vector.broadcast %8 : vector<1x32xf32> to vector<16x32xf32>
    %85 = arith.mulf %83, %84 : vector<16x32xf32>
    %86 = vector.broadcast %9 : vector<1x32xf32> to vector<16x32xf32>
    %87 = arith.addf %85, %86 : vector<16x32xf32>
    %cst_29 = arith.constant dense<0.000000e+00> : vector<16x64xf32>
    %88 = tpu.matmul %87, %1, %cst_29 {dimension_numbers = #tpu.dot_dimension_numbers<[1], [0], [0], [1], [0, 0, 1, 1], [], []>} : vector<16x32xf32>, vector<32x64xf32>, vector<16x64xf32> -> vector<16x64xf32>
    %89 = vector.broadcast %4 : vector<1x64xf32> to vector<16x64xf32>
    %90 = arith.addf %88, %89 : vector<16x64xf32>
    %cst_30 = arith.constant 5.000000e-01 : f32
    %91 = vector.broadcast %cst_30 : f32 to vector<16x64xf32>
    %92 = arith.mulf %91, %90 : vector<16x64xf32>
    %cst_31 = arith.constant 0.707106769 : f32
    %93 = vector.broadcast %cst_31 : f32 to vector<16x64xf32>
    %94 = arith.mulf %90, %93 : vector<16x64xf32>
    %95 = math.erf %94 : vector<16x64xf32>
    %cst_32 = arith.constant 1.000000e+00 : f32
    %96 = vector.broadcast %cst_32 : f32 to vector<16x64xf32>
    %97 = arith.addf %96, %95 : vector<16x64xf32>
    %98 = arith.mulf %92, %97 : vector<16x64xf32>
    %cst_33 = arith.constant dense<0.000000e+00> : vector<16x32xf32>
    %99 = tpu.matmul %98, %2, %cst_33 {dimension_numbers = #tpu.dot_dimension_numbers<[1], [0], [0], [1], [0, 0, 1, 1], [], []>} : vector<16x64xf32>, vector<64x32xf32>, vector<16x32xf32> -> vector<16x32xf32>
    %100 = vector.broadcast %5 : vector<1x32xf32> to vector<16x32xf32>
    %101 = arith.addf %99, %100 : vector<16x32xf32>
    %102 = arith.addf %65, %101 : vector<16x32xf32>
    %103 = vector.shape_cast %102 : vector<16x32xf32> to vector<2x8x32xf32>
    %c0_34 = arith.constant 0 : index
    %c0_35 = arith.constant 0 : index
    %c0_36 = arith.constant 0 : index
    %104 = vector.load %arg2[%c0_34, %c0_35, %c0_36] : memref<2x8x32xf32, #tpu.memory_space<vmem>>, vector<2x8x32xf32>
    tpu.vector_store %arg2[%c0_34, %c0_35, %c0_36], %103 {strides = array<i32>} : memref<2x8x32xf32, #tpu.memory_space<vmem>>, vector<2x8x32xf32>,
    return
  }
}

</mosaic_0001>

<llo_original>
// kernel: tpu_custom_call.1
$region0: #{tpu_custom_call.1}
  #allocation0 [shape = 'u32[]', space=smem, size = 0x4, offset = 0x4, fixed_abs, tag = 'smem constant byte address 0x4 - core index']
  #allocation1 [shape = 'u32[144,128]{1,0:T(1,128)}', space=vmem, size = 0x12000, scoped, tag = 'internal scratch']
  %s0 = inlined_call_operand.hbm [shape: f32[2,8,32], index: 0, kind: input, shape index: {}]
  %s1 = inlined_call_operand.hbm [shape: f32[136,128], index: 1, kind: input, shape index: {}]
  %s2 = inlined_call_operand.hbm [shape: f32[2,8,32], index: 2, kind: output, shape index: {}]
  %s3 = sld [smem:[#allocation0]]
  $region26: #{tpu_custom_call.1} parent=0
    _
  %s5 = ssub.s32 1, %s3
  %s6 = scalar_select 0, %s5, %s3
  $region1: #{tpu_custom_call.1} parent=0
    #allocation2 [shape = 'u8[8192]{0}', space=vmem, size = 0x2000, scoped, tag = 'input window, operand 0, single buffered']
    #allocation3 [shape = 's32[1]{0}', space=sflag, size = 0x4, scoped, tag = 'scoped memory for tpu_custom_call.1']
    #allocation4 [shape = 's32[1]{0}', space=sflag, size = 0x4, scoped, tag = 'scoped memory for tpu_custom_call.1']
    #allocation5 [shape = 'u8[69632]{0}', space=vmem, size = 0x11000, scoped, tag = 'input window, operand 1, single buffered']
    #allocation6 [shape = 's32[1]{0}', space=sflag, size = 0x4, scoped, tag = 'scoped memory for tpu_custom_call.1']
    #allocation7 [shape = 'u8[8192]{0}', space=vmem, size = 0x2000, scoped, tag = 'output window, operand 0, single buffered']
    %7 = vsyncpa [#allocation3], 0
    %8 = vsyncpa [#allocation6], 0
    %9 = vsyncpa [#allocation4], 0
    // Predicated region
    $region2: #{tpu_custom_call.1} parent=1 // pred_check
      _
    $region3: #{tpu_custom_call.1} parent=1 // pred_check_branch
      %11 = sbr.rel (0) target = $region5
    $region4: #{tpu_custom_call.1} parent=1 // pred_region
      %s13 = ssub.s32 256, 256
      %14 = vsyncadd [#allocation3], %s13
      %s15 = sshll.u32 [#allocation2], 4
      %s16 = int_to_ptr.vmem [resolvable:$true] %s15
      %21 = dma.hbm_to_vmem [thread:$0]  %s0, 256, %s16, [#allocation3], 128, 128, 8
    $region5: #{tpu_custom_call.1} parent=1 // pred_fallthru
      _
    // Predicated region
    $region6: #{tpu_custom_call.1} parent=1 // pred_check
      _
    $region7: #{tpu_custom_call.1} parent=1 // pred_check_branch
      %23 = sbr.rel (0) target = $region9
    $region8: #{tpu_custom_call.1} parent=1 // pred_region
      %s25 = ssub.s32 2176, 2176
      %26 = vsyncadd [#allocation6], %s25
      %s27 = sshll.u32 [#allocation5], 4
      %s28 = int_to_ptr.vmem [resolvable:$true] %s27
      %33 = dma.hbm_to_vmem [thread:$0]  %s1, 2176, %s28, [#allocation6], 128, 128, 8
    $region9: #{tpu_custom_call.1} parent=1 // pred_fallthru
      _
    // Predicated region
    $region10: #{tpu_custom_call.1} parent=1 // pred_check
      _
    $region11: #{tpu_custom_call.1} parent=1 // pred_check_branch
      %35 = sbr.rel (0) target = $region13
    $region12: #{tpu_custom_call.1} parent=1 // pred_region
      %36 = dma.done [#allocation3], 256
    $region13: #{tpu_custom_call.1} parent=1 // pred_fallthru
      _
    // Predicated region
    $region14: #{tpu_custom_call.1} parent=1 // pred_check
      _
    $region15: #{tpu_custom_call.1} parent=1 // pred_check_branch
      %38 = sbr.rel (0) target = $region17
    $region16: #{tpu_custom_call.1} parent=1 // pred_region
      %39 = dma.done [#allocation6], 2176
    $region17: #{tpu_custom_call.1} parent=1 // pred_fallthru
      _
    %v40 = vld [vmem:[#allocation5] sm:$0xff]
    %v41 = vld [vmem:[#allocation5 + $0x8] sm:$0xff]
    %v42 = vld [vmem:[#allocation5 + $0x10] sm:$0xff]
    %v43 = vld [vmem:[#allocation5 + $0x18] sm:$0xff]
    %v44 = vld [vmem:[#allocation5 + $0x20] sm:$0xff]
    %v45 = vld [vmem:[#allocation5 + $0x28] sm:$0xff]
    %v46 = vld [vmem:[#allocation5 + $0x30] sm:$0xff]
    %v47 = vld [vmem:[#allocation5 + $0x38] sm:$0xff]
    %v48 = vld [vmem:[#allocation5 + $0x40] sm:$0xff]
    %v49 = vld [vmem:[#allocation5 + $0x48] sm:$0xff]
    %v50 = vld [vmem:[#allocation5 + $0x50] sm:$0xff]
    %v51 = vld [vmem:[#allocation5 + $0x58] sm:$0xff]
    %v52 = vld [vmem:[#allocation5 + $0x60] sm:$0xff]
    %v53 = vld [vmem:[#allocation5 + $0x68] sm:$0xff]
    %v54 = vld [vmem:[#allocation5 + $0x70] sm:$0xff]
    %v55 = vld [vmem:[#allocation5 + $0x78] sm:$0xff]
    %v56 = vld [vmem:[#allocation5 + $0x80] sm:$0x1]
    %v57 = vld [vmem:[#allocation5 + $0x81] sm:$0x1]
    %v58 = vld [vmem:[#allocation5 + $0x82] sm:$0x1]
    %v59 = vld [vmem:[#allocation5 + $0x83] sm:$0x1]
    %v60 = vld [vmem:[#allocation5 + $0x84] sm:$0x1]
    %v61 = vld [vmem:[#allocation5 + $0x85] sm:$0x1]
    %v62 = vld [vmem:[#allocation5 + $0x86] sm:$0x1]
    %v63 = vld [vmem:[#allocation2] sm:$0xff]
    %v64 = vld [vmem:[#allocation2 + $0x8] sm:$0xff]
    %vm65 = vcmask 261120
    %v66 = vsel %vm65, %v63, 0.0
    %67 = vadd.xlane.f32.xlu0 %v66
    %v68 = vpop.xlane.xlu0 %67
    %v69 = vsel %vm65, %v64, 0.0
    %70 = vadd.xlane.f32.xlu0 %v69
    %v71 = vpop.xlane.xlu0 %70
    %v72 = vrcp.pop 32.0
    %v73 = vmul.f32 %v68, %v72
    %v74 = vmul.f32 %v71, %v72
    %v75 = vsub.f32 %v63, %v73
    %v76 = vsub.f32 %v64, %v74
    %v77 = vmul.f32 %v75, %v75
    %v78 = vmul.f32 %v76, %v76
    %v79 = vsel %vm65, %v77, 0.0
    %80 = vadd.xlane.f32.xlu0 %v79
    %v81 = vpop.xlane.xlu0 %80
    %v82 = vsel %vm65, %v78, 0.0
    %83 = vadd.xlane.f32.xlu0 %v82
    %v84 = vpop.xlane.xlu0 %83
    %v85 = vmul.f32 %v81, %v72
    %v86 = vmul.f32 %v84, %v72
    %v87 = vadd.f32 %v85, 1e-05
    %v88 = vadd.f32 %v86, 1e-05
    %v89 = vrsqrt.pop %v87
    %v90 = vrsqrt.pop %v88
    %v91 = vmul.f32 %v75, %v89
    %v92 = vmul.f32 %v76, %v90
    %v93 = vlaneseq
    %v94 = vshrl.u32 %v93, 7
    %v95 = vsub.s32 0, %v94
    %v96 = vrot.slane %v59, %v95
    %v97 = vmul.f32 %v91, %v96
    %v98 = vmul.f32 %v92, %v96
    %v99 = vlaneseq
    %v100 = vshrl.u32 %v99, 7
    %v101 = vsub.s32 0, %v100
    %v102 = vrot.slane %v60, %v101
    %v103 = vadd.f32 %v97, %v102
    %v104 = vadd.f32 %v98, %v102
    %v106 = vsel %vm65, %v103, 0
    %v109 = vsel %vm65, %v104, 0
    %111 = vmatprep.subr.mxu0 0.0
    %112 = vmatpush1.msra.mxu0 %v40
    %113 = vmatprep.subr.mxu0 0.0
    %114 = vmatpush1.msra.mxu0 %v41
    %115 = vmatprep.subr.mxu0 0.0
    %116 = vmatpush1.msra.mxu0 %v42
    %117 = vmatprep.subr.mxu0 0.0
    %118 = vmatpush1.msra.mxu0 %v43
    %119 = vmatprep.subr.mxu0 0.0
    %120 = vmatpush1.msra.mxu0 0.0
    %121 = vmatprep.subr.mxu0 0.0
    %122 = vmatpush1.msra.mxu0 0.0
    %123 = vmatprep.subr.mxu0 0.0
    %124 = vmatpush1.msra.mxu0 0.0
    %125 = vmatprep.subr.mxu0 0.0
    %126 = vmatpush1.msra.mxu0 0.0
    %127 = vmatprep.subr.mxu0 0.0
    %128 = vmatpush1.msra.mxu0 0.0
    %129 = vmatprep.subr.mxu0 0.0
    %130 = vmatpush1.msra.mxu0 0.0
    %131 = vmatprep.subr.mxu0 0.0
    %132 = vmatpush1.msra.mxu0 0.0
    %133 = vmatprep.subr.mxu0 0.0
    %134 = vmatpush1.msra.mxu0 0.0
    %135 = vmatprep.subr.mxu0 0.0
    %136 = vmatpush1.msra.mxu0 0.0
    %137 = vmatprep.subr.mxu0 0.0
    %138 = vmatpush1.msra.mxu0 0.0
    %139 = vmatprep.subr.mxu0 0.0
    %140 = vmatpush1.msra.mxu0 0.0
    %141 = vmatprep.subr.mxu0 0.0
    %142 = vmatpush1.msra.mxu0 0.0
    %143 = vmatprep.subr.mxu0 0.0
    %144 = vmatpush1.msra.mxu0 0.0
    %145 = vmatprep.subr.mxu0 0.0
    %146 = vmatpush1.msra.mxu0 0.0
    %147 = vmatprep.subr.mxu0 0.0
    %148 = vmatpush1.msra.mxu0 0.0
    %149 = vmatprep.subr.mxu0 0.0
    %150 = vmatpush1.msra.mxu0 0.0
    %151 = vmatprep.subr.mxu0 0.0
    %152 = vmatpush1.msra.mxu0 0.0
    %153 = vmatprep.subr.mxu0 0.0
    %154 = vmatpush1.msra.mxu0 0.0
    %155 = vmatprep.subr.mxu0 0.0
    %156 = vmatpush1.msra.mxu0 0.0
    %157 = vmatprep.subr.mxu0 0.0
    %158 = vmatpush1.msra.mxu0 0.0
    %159 = vmatprep.subr.mxu0 0.0
    %160 = vmatpush1.msra.mxu0 0.0
    %161 = vmatprep.subr.mxu0 0.0
    %162 = vmatpush1.msra.mxu0 0.0
    %163 = vmatprep.subr.mxu0 0.0
    %164 = vmatpush1.msra.mxu0 0.0
    %165 = vmatprep.subr.mxu0 0.0
    %166 = vmatpush1.msra.mxu0 0.0
    %167 = vmatprep.subr.mxu0 0.0
    %168 = vmatpush1.msra.mxu0 0.0
    %169 = vmatprep.subr.mxu0 0.0
    %170 = vmatpush1.msra.mxu0 0.0
    %171 = vmatprep.subr.mxu0 0.0
    %172 = vmatpush1.msra.mxu0 0.0
    %173 = vmatprep.subr.mxu0 0.0
    %174 = vmatpush1.msra.mxu0 0.0
    %175 = vmatprep.mubr.f32.mxu0 0.0
    %176 = vmatmul.mubr.f32.gmra.mrb[0].mxu0 %v106
    %v177 = vpop.f32.mrb[0].mxu0
    %v178 = vadd.f32 0.0, %v177
    %v179 = vpop.f32.mrb[0].mxu0
    %180 = vmatprep.mubr.f32.mxu0 0.0
    %181 = vmatmul.mubr.f32.gmra.mrb[0].mxu0 %v109
    %v182 = vpop.f32.mrb[0].mxu0
    %v183 = vadd.f32 0.0, %v182
    %v184 = vpop.f32.mrb[0].mxu0
    %185 = vdwg.mxu0
    %v186 = vlaneseq
    %v187 = vshrl.u32 %v186, 7
    %v188 = vsub.s32 0, %v187
    %v189 = vrot.slane %v56, %v188
    %v190 = vadd.f32 %v178, %v189
    %v191 = vadd.f32 %v183, %v189
    %v192 = vmul.f32 %v103, %v103
    %v193 = vmul.f32 %v104, %v104
    %v194 = vsel %vm65, %v192, 0.0
    %195 = vadd.xlane.f32.xlu0 %v194
    %v196 = vpop.xlane.xlu0 %195
    %v197 = vsel %vm65, %v193, 0.0
    %198 = vadd.xlane.f32.xlu0 %v197
    %v199 = vpop.xlane.xlu0 %198
    %v200 = vmax.f32 %v196, 1e-24
    %v201 = vmax.f32 %v199, 1e-24
    %v202 = vrsqrt.pop %v200
    %v203 = vrsqrt.pop %v201
    %v204 = vmul.f32 %v103, %v202
    %v205 = vmul.f32 %v104, %v203
    %v206 = vmul.f32 %v178, %v202
    %v207 = vmul.f32 %v183, %v203
    %209 = vrot.lane.b32.xlu0 %v206, 96
    %v210 = vpop.permute.xlu0 %209
    %v211 = vsel %vm65, %v210, 0
    %v214 = vsel %vm65, %v204, 0
    %216 = vmatprep.subr.mxu0 0.0
    %217 = vmatpush1.xpose.msra.mxu0 %v214
    %218 = vmatprep.subr.mxu0 0.0
    %219 = vmatpush1.xpose.msra.mxu0 0.0
    %220 = vmatprep.subr.mxu0 0.0
    %221 = vmatpush1.xpose.msra.mxu0 0.0
    %222 = vmatprep.subr.mxu0 0.0
    %223 = vmatpush1.xpose.msra.mxu0 0.0
    %224 = vmatprep.subr.mxu0 0.0
    %225 = vmatpush1.xpose.msra.mxu0 0.0
    %226 = vmatprep.subr.mxu0 0.0
    %227 = vmatpush1.xpose.msra.mxu0 0.0
    %228 = vmatprep.subr.mxu0 0.0
    %229 = vmatpush1.xpose.msra.mxu0 0.0
    %230 = vmatprep.subr.mxu0 0.0
    %231 = vmatpush1.xpose.msra.mxu0 0.0
    %232 = vmatprep.subr.mxu0 0.0
    %233 = vmatpush1.xpose.msra.mxu0 0.0
    %234 = vmatprep.subr.mxu0 0.0
    %235 = vmatpush1.xpose.msra.mxu0 0.0
    %236 = vmatprep.subr.mxu0 0.0
    %237 = vmatpush1.xpose.msra.mxu0 0.0
    %238 = vmatprep.subr.mxu0 0.0
    %239 = vmatpush1.xpose.msra.mxu0 0.0
    %240 = vmatprep.subr.mxu0 0.0
    %241 = vmatpush1.xpose.msra.mxu0 0.0
    %242 = vmatprep.subr.mxu0 0.0
    %243 = vmatpush1.xpose.msra.mxu0 0.0
    %244 = vmatprep.subr.mxu0 0.0
    %245 = vmatpush1.xpose.msra.mxu0 0.0
    %246 = vmatprep.subr.mxu0 0.0
    %247 = vmatpush1.xpose.msra.mxu0 0.0
    %248 = vmatprep.subr.mxu0 0.0
    %249 = vmatpush1.xpose.msra.mxu0 0.0
    %250 = vmatprep.subr.mxu0 0.0
    %251 = vmatpush1.xpose.msra.mxu0 0.0
    %252 = vmatprep.subr.mxu0 0.0
    %253 = vmatpush1.xpose.msra.mxu0 0.0
    %254 = vmatprep.subr.mxu0 0.0
    %255 = vmatpush1.xpose.msra.mxu0 0.0
    %256 = vmatprep.subr.mxu0 0.0
    %257 = vmatpush1.xpose.msra.mxu0 0.0
    %258 = vmatprep.subr.mxu0 0.0
    %259 = vmatpush1.xpose.msra.mxu0 0.0
    %260 = vmatprep.subr.mxu0 0.0
    %261 = vmatpush1.xpose.msra.mxu0 0.0
    %262 = vmatprep.subr.mxu0 0.0
    %263 = vmatpush1.xpose.msra.mxu0 0.0
    %264 = vmatprep.subr.mxu0 0.0
    %265 = vmatpush1.xpose.msra.mxu0 0.0
    %266 = vmatprep.subr.mxu0 0.0
    %267 = vmatpush1.xpose.msra.mxu0 0.0
    %268 = vmatprep.subr.mxu0 0.0
    %269 = vmatpush1.xpose.msra.mxu0 0.0
    %270 = vmatprep.subr.mxu0 0.0
    %271 = vmatpush1.xpose.msra.mxu0 0.0
    %272 = vmatprep.subr.mxu0 0.0
    %273 = vmatpush1.xpose.msra.mxu0 0.0
    %274 = vmatprep.subr.mxu0 0.0
    %275 = vmatpush1.xpose.msra.mxu0 0.0
    %276 = vmatprep.subr.mxu0 0.0
    %277 = vmatpush1.xpose.msra.mxu0 0.0
    %278 = vmatprep.subr.mxu0 0.0
    %279 = vmatpush1.xpose.msra.mxu0 0.0
    %280 = vmatprep.mubr.f32.mxu0 0.0
    %281 = vmatmul.mubr.f32.gmra.mrb[0].mxu0 %v211
    %v282 = vpop.f32.mrb[0].mxu0
    %v283 = vadd.f32 0.0, %v282
    %v284 = vpop.f32.mrb[0].mxu0
    %285 = vdwg.mxu0
    %287 = vrot.lane.b32.xlu0 %v207, 96
    %v288 = vpop.permute.xlu0 %287
    %v289 = vsel %vm65, %v288, 0
    %v292 = vsel %vm65, %v205, 0
    %294 = vmatprep.subr.mxu0 0.0
    %295 = vmatpush1.xpose.msra.mxu0 %v292
    %296 = vmatprep.subr.mxu0 0.0
    %297 = vmatpush1.xpose.msra.mxu0 0.0
    %298 = vmatprep.subr.mxu0 0.0
    %299 = vmatpush1.xpose.msra.mxu0 0.0
    %300 = vmatprep.subr.mxu0 0.0
    %301 = vmatpush1.xpose.msra.mxu0 0.0
    %302 = vmatprep.subr.mxu0 0.0
    %303 = vmatpush1.xpose.msra.mxu0 0.0
    %304 = vmatprep.subr.mxu0 0.0
    %305 = vmatpush1.xpose.msra.mxu0 0.0
    %306 = vmatprep.subr.mxu0 0.0
    %307 = vmatpush1.xpose.msra.mxu0 0.0
    %308 = vmatprep.subr.mxu0 0.0
    %309 = vmatpush1.xpose.msra.mxu0 0.0
    %310 = vmatprep.subr.mxu0 0.0
    %311 = vmatpush1.xpose.msra.mxu0 0.0
    %312 = vmatprep.subr.mxu0 0.0
    %313 = vmatpush1.xpose.msra.mxu0 0.0
    %314 = vmatprep.subr.mxu0 0.0
    %315 = vmatpush1.xpose.msra.mxu0 0.0
    %316 = vmatprep.subr.mxu0 0.0
    %317 = vmatpush1.xpose.msra.mxu0 0.0
    %318 = vmatprep.subr.mxu0 0.0
    %319 = vmatpush1.xpose.msra.mxu0 0.0
    %320 = vmatprep.subr.mxu0 0.0
    %321 = vmatpush1.xpose.msra.mxu0 0.0
    %322 = vmatprep.subr.mxu0 0.0
    %323 = vmatpush1.xpose.msra.mxu0 0.0
    %324 = vmatprep.subr.mxu0 0.0
    %325 = vmatpush1.xpose.msra.mxu0 0.0
    %326 = vmatprep.subr.mxu0 0.0
    %327 = vmatpush1.xpose.msra.mxu0 0.0
    %328 = vmatprep.subr.mxu0 0.0
    %329 = vmatpush1.xpose.msra.mxu0 0.0
    %330 = vmatprep.subr.mxu0 0.0
    %331 = vmatpush1.xpose.msra.mxu0 0.0
    %332 = vmatprep.subr.mxu0 0.0
    %333 = vmatpush1.xpose.msra.mxu0 0.0
    %334 = vmatprep.subr.mxu0 0.0
    %335 = vmatpush1.xpose.msra.mxu0 0.0
    %336 = vmatprep.subr.mxu0 0.0
    %337 = vmatpush1.xpose.msra.mxu0 0.0
    %338 = vmatprep.subr.mxu0 0.0
    %339 = vmatpush1.xpose.msra.mxu0 0.0
    %340 = vmatprep.subr.mxu0 0.0
    %341 = vmatpush1.xpose.msra.mxu0 0.0
    %342 = vmatprep.subr.mxu0 0.0
    %343 = vmatpush1.xpose.msra.mxu0 0.0
    %344 = vmatprep.subr.mxu0 0.0
    %345 = vmatpush1.xpose.msra.mxu0 0.0
    %346 = vmatprep.subr.mxu0 0.0
    %347 = vmatpush1.xpose.msra.mxu0 0.0
    %348 = vmatprep.subr.mxu0 0.0
    %349 = vmatpush1.xpose.msra.mxu0 0.0
    %350 = vmatprep.subr.mxu0 0.0
    %351 = vmatpush1.xpose.msra.mxu0 0.0
    %352 = vmatprep.subr.mxu0 0.0
    %353 = vmatpush1.xpose.msra.mxu0 0.0
    %354 = vmatprep.subr.mxu0 0.0
    %355 = vmatpush1.xpose.msra.mxu0 0.0
    %356 = vmatprep.subr.mxu0 0.0
    %357 = vmatpush1.xpose.msra.mxu0 0.0
    %358 = vmatprep.mubr.f32.mxu0 0.0
    %359 = vmatmul.mubr.f32.gmra.mrb[0].mxu0 %v289
    %v360 = vpop.f32.mrb[0].mxu0
    %v361 = vadd.f32 0.0, %v360
    %v362 = vpop.f32.mrb[0].mxu0
    %363 = vdwg.mxu0
    %vm364 = vcmask 64512
    %v365 = vsel %vm364, %v283, -inf
    %366 = vmax.xlane.f32.xlu0 %v365
    %v367 = vpop.xlane.xlu0 %366
    %v368 = vsel %vm364, %v361, -inf
    %369 = vmax.xlane.f32.xlu0 %v368
    %v370 = vpop.xlane.xlu0 %369
    %v371 = vsub.f32 %v283, %v367
    %v372 = vsub.f32 %v361, %v370
    %v373 = vmul.f32 %v371, 1.442695
    %v374 = vpow.pop %v373
    %v375 = vmul.f32 %v372, 1.442695
    %v376 = vpow.pop %v375
    %v377 = vsel %vm364, %v374, 0.0
    %378 = vadd.xlane.f32.xlu0 %v377
    %v379 = vpop.xlane.xlu0 %378
    %v380 = vsel %vm364, %v376, 0.0
    %381 = vadd.xlane.f32.xlu0 %v380
    %v382 = vpop.xlane.xlu0 %381
    %v383 = vrcp.pop %v379
    %v384 = vrcp.pop %v382
    %v385 = vmul.f32 %v374, %v383
    %v386 = vmul.f32 %v376, %v384
    %v388 = vsel %vm364, %v385, 0
    %390 = vmatprep.subr.mxu0 0.0
    %391 = vmatpush1.msra.mxu0 %v190
    %392 = vmatprep.subr.mxu0 0.0
    %393 = vmatpush1.msra.mxu0 0.0
    %394 = vmatprep.subr.mxu0 0.0
    %395 = vmatpush1.msra.mxu0 0.0
    %396 = vmatprep.subr.mxu0 0.0
    %397 = vmatpush1.msra.mxu0 0.0
    %398 = vmatprep.subr.mxu0 0.0
    %399 = vmatpush1.msra.mxu0 0.0
    %400 = vmatprep.subr.mxu0 0.0
    %401 = vmatpush1.msra.mxu0 0.0
    %402 = vmatprep.subr.mxu0 0.0
    %403 = vmatpush1.msra.mxu0 0.0
    %404 = vmatprep.subr.mxu0 0.0
    %405 = vmatpush1.msra.mxu0 0.0
    %406 = vmatprep.subr.mxu0 0.0
    %407 = vmatpush1.msra.mxu0 0.0
    %408 = vmatprep.subr.mxu0 0.0
    %409 = vmatpush1.msra.mxu0 0.0
    %410 = vmatprep.subr.mxu0 0.0
    %411 = vmatpush1.msra.mxu0 0.0
    %412 = vmatprep.subr.mxu0 0.0
    %413 = vmatpush1.msra.mxu0 0.0
    %414 = vmatprep.subr.mxu0 0.0
    %415 = vmatpush1.msra.mxu0 0.0
    %416 = vmatprep.subr.mxu0 0.0
    %417 = vmatpush1.msra.mxu0 0.0
    %418 = vmatprep.subr.mxu0 0.0
    %419 = vmatpush1.msra.mxu0 0.0
    %420 = vmatprep.subr.mxu0 0.0
    %421 = vmatpush1.msra.mxu0 0.0
    %422 = vmatprep.subr.mxu0 0.0
    %423 = vmatpush1.msra.mxu0 0.0
    %424 = vmatprep.subr.mxu0 0.0
    %425 = vmatpush1.msra.mxu0 0.0
    %426 = vmatprep.subr.mxu0 0.0
    %427 = vmatpush1.msra.mxu0 0.0
    %428 = vmatprep.subr.mxu0 0.0
    %429 = vmatpush1.msra.mxu0 0.0
    %430 = vmatprep.subr.mxu0 0.0
    %431 = vmatpush1.msra.mxu0 0.0
    %432 = vmatprep.subr.mxu0 0.0
    %433 = vmatpush1.msra.mxu0 0.0
    %434 = vmatprep.subr.mxu0 0.0
    %435 = vmatpush1.msra.mxu0 0.0
    %436 = vmatprep.subr.mxu0 0.0
    %437 = vmatpush1.msra.mxu0 0.0
    %438 = vmatprep.subr.mxu0 0.0
    %439 = vmatpush1.msra.mxu0 0.0
    %440 = vmatprep.subr.mxu0 0.0
    %441 = vmatpush1.msra.mxu0 0.0
    %442 = vmatprep.subr.mxu0 0.0
    %443 = vmatpush1.msra.mxu0 0.0
    %444 = vmatprep.subr.mxu0 0.0
    %445 = vmatpush1.msra.mxu0 0.0
    %446 = vmatprep.subr.mxu0 0.0
    %447 = vmatpush1.msra.mxu0 0.0
    %448 = vmatprep.subr.mxu0 0.0
    %449 = vmatpush1.msra.mxu0 0.0
    %450 = vmatprep.subr.mxu0 0.0
    %451 = vmatpush1.msra.mxu0 0.0
    %452 = vmatprep.subr.mxu0 0.0
    %453 = vmatpush1.msra.mxu0 0.0
    %454 = vmatprep.mubr.f32.mxu0 0.0
    %455 = vmatmul.mubr.f32.gmra.mrb[0].mxu0 %v388
    %v456 = vpop.f32.mrb[0].mxu0
    %v457 = vadd.f32 0.0, %v456
    %v458 = vpop.f32.mrb[0].mxu0
    %459 = vdwg.mxu0
    %v461 = vsel %vm364, %v386, 0
    %463 = vmatprep.subr.mxu0 0.0
    %464 = vmatpush1.msra.mxu0 %v191
    %465 = vmatprep.subr.mxu0 0.0
    %466 = vmatpush1.msra.mxu0 0.0
    %467 = vmatprep.subr.mxu0 0.0
    %468 = vmatpush1.msra.mxu0 0.0
    %469 = vmatprep.subr.mxu0 0.0
    %470 = vmatpush1.msra.mxu0 0.0
    %471 = vmatprep.subr.mxu0 0.0
    %472 = vmatpush1.msra.mxu0 0.0
    %473 = vmatprep.subr.mxu0 0.0
    %474 = vmatpush1.msra.mxu0 0.0
    %475 = vmatprep.subr.mxu0 0.0
    %476 = vmatpush1.msra.mxu0 0.0
    %477 = vmatprep.subr.mxu0 0.0
    %478 = vmatpush1.msra.mxu0 0.0
    %479 = vmatprep.subr.mxu0 0.0
    %480 = vmatpush1.msra.mxu0 0.0
    %481 = vmatprep.subr.mxu0 0.0
    %482 = vmatpush1.msra.mxu0 0.0
    %483 = vmatprep.subr.mxu0 0.0
    %484 = vmatpush1.msra.mxu0 0.0
    %485 = vmatprep.subr.mxu0 0.0
    %486 = vmatpush1.msra.mxu0 0.0
    %487 = vmatprep.subr.mxu0 0.0
    %488 = vmatpush1.msra.mxu0 0.0
    %489 = vmatprep.subr.mxu0 0.0
    %490 = vmatpush1.msra.mxu0 0.0
    %491 = vmatprep.subr.mxu0 0.0
    %492 = vmatpush1.msra.mxu0 0.0
    %493 = vmatprep.subr.mxu0 0.0
    %494 = vmatpush1.msra.mxu0 0.0
    %495 = vmatprep.subr.mxu0 0.0
    %496 = vmatpush1.msra.mxu0 0.0
    %497 = vmatprep.subr.mxu0 0.0
    %498 = vmatpush1.msra.mxu0 0.0
    %499 = vmatprep.subr.mxu0 0.0
    %500 = vmatpush1.msra.mxu0 0.0
    %501 = vmatprep.subr.mxu0 0.0
    %502 = vmatpush1.msra.mxu0 0.0
    %503 = vmatprep.subr.mxu0 0.0
    %504 = vmatpush1.msra.mxu0 0.0
    %505 = vmatprep.subr.mxu0 0.0
    %506 = vmatpush1.msra.mxu0 0.0
    %507 = vmatprep.subr.mxu0 0.0
    %508 = vmatpush1.msra.mxu0 0.0
    %509 = vmatprep.subr.mxu0 0.0
    %510 = vmatpush1.msra.mxu0 0.0
    %511 = vmatprep.subr.mxu0 0.0
    %512 = vmatpush1.msra.mxu0 0.0
    %513 = vmatprep.subr.mxu0 0.0
    %514 = vmatpush1.msra.mxu0 0.0
    %515 = vmatprep.subr.mxu0 0.0
    %516 = vmatpush1.msra.mxu0 0.0
    %517 = vmatprep.subr.mxu0 0.0
    %518 = vmatpush1.msra.mxu0 0.0
    %519 = vmatprep.subr.mxu0 0.0
    %520 = vmatpush1.msra.mxu0 0.0
    %521 = vmatprep.subr.mxu0 0.0
    %522 = vmatpush1.msra.mxu0 0.0
    %523 = vmatprep.subr.mxu0 0.0
    %524 = vmatpush1.msra.mxu0 0.0
    %525 = vmatprep.subr.mxu0 0.0
    %526 = vmatpush1.msra.mxu0 0.0
    %527 = vmatprep.mubr.f32.mxu0 0.0
    %528 = vmatmul.mubr.f32.gmra.mrb[0].mxu0 %v461
    %v529 = vpop.f32.mrb[0].mxu0
    %v530 = vadd.f32 0.0, %v529
    %v531 = vpop.f32.mrb[0].mxu0
    %532 = vdwg.mxu0
    %v533 = vadd.f32 %v63, %v457
    %v534 = vadd.f32 %v64, %v530
    %v535 = vsel %vm65, %v533, 0.0
    %536 = vadd.xlane.f32.xlu0 %v535
    %v537 = vpop.xlane.xlu0 %536
    %v538 = vsel %vm65, %v534, 0.0
    %539 = vadd.xlane.f32.xlu0 %v538
    %v540 = vpop.xlane.xlu0 %539
    %v541 = vmul.f32 %v537, %v72
    %v542 = vmul.f32 %v540, %v72
    %v543 = vsub.f32 %v533, %v541
    %v544 = vsub.f32 %v534, %v542
    %v545 = vmul.f32 %v543, %v543
    %v546 = vmul.f32 %v544, %v544
    %v547 = vsel %vm65, %v545, 0.0
    %548 = vadd.xlane.f32.xlu0 %v547
    %v549 = vpop.xlane.xlu0 %548
    %v550 = vsel %vm65, %v546, 0.0
    %551 = vadd.xlane.f32.xlu0 %v550
    %v552 = vpop.xlane.xlu0 %551
    %v553 = vmul.f32 %v549, %v72
    %v554 = vmul.f32 %v552, %v72
    %v555 = vadd.f32 %v553, 1e-05
    %v556 = vadd.f32 %v554, 1e-05
    %v557 = vrsqrt.pop %v555
    %v558 = vrsqrt.pop %v556
    %v559 = vmul.f32 %v543, %v557
    %v560 = vmul.f32 %v544, %v558
    %v561 = vlaneseq
    %v562 = vshrl.u32 %v561, 7
    %v563 = vsub.s32 0, %v562
    %v564 = vrot.slane %v61, %v563
    %v565 = vmul.f32 %v559, %v564
    %v566 = vmul.f32 %v560, %v564
    %v567 = vlaneseq
    %v568 = vshrl.u32 %v567, 7
    %v569 = vsub.s32 0, %v568
    %v570 = vrot.slane %v62, %v569
    %v571 = vadd.f32 %v565, %v570
    %v572 = vadd.f32 %v566, %v570
    %v573 = vlaneseq
    %v574 = vshrl.u32 %v573, 7
    %v575 = vsub.s32 0, %v574
    %v576 = vrot.slane %v57, %v575
    %v578 = vsel %vm65, %v571, 0
    %v581 = vsel %vm65, %v572, 0
    %583 = vmatprep.subr.mxu0 0.0
    %584 = vmatpush1.msra.mxu0 %v44
    %585 = vmatprep.subr.mxu0 0.0
    %586 = vmatpush1.msra.mxu0 %v45
    %587 = vmatprep.subr.mxu0 0.0
    %588 = vmatpush1.msra.mxu0 %v46
    %589 = vmatprep.subr.mxu0 0.0
    %590 = vmatpush1.msra.mxu0 %v47
    %591 = vmatprep.subr.mxu0 0.0
    %592 = vmatpush1.msra.mxu0 0.0
    %593 = vmatprep.subr.mxu0 0.0
    %594 = vmatpush1.msra.mxu0 0.0
    %595 = vmatprep.subr.mxu0 0.0
    %596 = vmatpush1.msra.mxu0 0.0
    %597 = vmatprep.subr.mxu0 0.0
    %598 = vmatpush1.msra.mxu0 0.0
    %599 = vmatprep.subr.mxu0 0.0
    %600 = vmatpush1.msra.mxu0 0.0
    %601 = vmatprep.subr.mxu0 0.0
    %602 = vmatpush1.msra.mxu0 0.0
    %603 = vmatprep.subr.mxu0 0.0
    %604 = vmatpush1.msra.mxu0 0.0
    %605 = vmatprep.subr.mxu0 0.0
    %606 = vmatpush1.msra.mxu0 0.0
    %607 = vmatprep.subr.mxu0 0.0
    %608 = vmatpush1.msra.mxu0 0.0
    %609 = vmatprep.subr.mxu0 0.0
    %610 = vmatpush1.msra.mxu0 0.0
    %611 = vmatprep.subr.mxu0 0.0
    %612 = vmatpush1.msra.mxu0 0.0
    %613 = vmatprep.subr.mxu0 0.0
    %614 = vmatpush1.msra.mxu0 0.0
    %615 = vmatprep.subr.mxu0 0.0
    %616 = vmatpush1.msra.mxu0 0.0
    %617 = vmatprep.subr.mxu0 0.0
    %618 = vmatpush1.msra.mxu0 0.0
    %619 = vmatprep.subr.mxu0 0.0
    %620 = vmatpush1.msra.mxu0 0.0
    %621 = vmatprep.subr.mxu0 0.0
    %622 = vmatpush1.msra.mxu0 0.0
    %623 = vmatprep.subr.mxu0 0.0
    %624 = vmatpush1.msra.mxu0 0.0
    %625 = vmatprep.subr.mxu0 0.0
    %626 = vmatpush1.msra.mxu0 0.0
    %627 = vmatprep.subr.mxu0 0.0
    %628 = vmatpush1.msra.mxu0 0.0
    %629 = vmatprep.subr.mxu0 0.0
    %630 = vmatpush1.msra.mxu0 0.0
    %631 = vmatprep.subr.mxu0 0.0
    %632 = vmatpush1.msra.mxu0 0.0
    %633 = vmatprep.subr.mxu0 0.0
    %634 = vmatpush1.msra.mxu0 0.0
    %635 = vmatprep.subr.mxu0 0.0
    %636 = vmatpush1.msra.mxu0 0.0
    %637 = vmatprep.subr.mxu0 0.0
    %638 = vmatpush1.msra.mxu0 0.0
    %639 = vmatprep.subr.mxu0 0.0
    %640 = vmatpush1.msra.mxu0 0.0
    %641 = vmatprep.subr.mxu0 0.0
    %642 = vmatpush1.msra.mxu0 0.0
    %643 = vmatprep.subr.mxu0 0.0
    %644 = vmatpush1.msra.mxu0 0.0
    %645 = vmatprep.subr.mxu0 0.0
    %646 = vmatpush1.msra.mxu0 0.0
    %647 = vmatprep.mubr.f32.mxu0 0.0
    %648 = vmatmul.mubr.f32.gmra.mrb[0].mxu0 %v578
    %v649 = vpop.f32.mrb[0].mxu0
    %v650 = vadd.f32 %v576, %v649
    %v651 = vpop.f32.mrb[0].mxu0
    %652 = vmatprep.mubr.f32.mxu0 0.0
    %653 = vmatmul.mubr.f32.gmra.mrb[0].mxu0 %v581
    %v654 = vpop.f32.mrb[0].mxu0
    %v655 = vadd.f32 %v576, %v654
    %v656 = vpop.f32.mrb[0].mxu0
    %657 = vdwg.mxu0
    %v658 = vmul.f32 %v650, 0.5
    %v659 = vmul.f32 %v655, 0.5
    %v660 = vmul.f32 %v650, 0.70710677
    %v661 = vmul.f32 %v655, 0.70710677
    %v662 = verf.f32.pop %v660
    %v663 = verf.f32.pop %v661
    %v664 = vadd.f32 %v662, 1.0
    %v665 = vadd.f32 %v663, 1.0
    %v666 = vmul.f32 %v658, %v664
    %v667 = vmul.f32 %v659, %v665
    %v668 = vlaneseq
    %v669 = vshrl.u32 %v668, 7
    %v670 = vsub.s32 0, %v669
    %v671 = vrot.slane %v58, %v670
    %vm672 = vcmask 523264
    %v674 = vsel %vm672, %v666, 0
    %v677 = vsel %vm672, %v667, 0
    %679 = vmatprep.subr.mxu0 0.0
    %680 = vmatpush1.msra.mxu0 %v48
    %681 = vmatprep.subr.mxu0 0.0
    %682 = vmatpush1.msra.mxu0 %v49
    %683 = vmatprep.subr.mxu0 0.0
    %684 = vmatpush1.msra.mxu0 %v50
    %685 = vmatprep.subr.mxu0 0.0
    %686 = vmatpush1.msra.mxu0 %v51
    %687 = vmatprep.subr.mxu0 0.0
    %688 = vmatpush1.msra.mxu0 %v52
    %689 = vmatprep.subr.mxu0 0.0
    %690 = vmatpush1.msra.mxu0 %v53
    %691 = vmatprep.subr.mxu0 0.0
    %692 = vmatpush1.msra.mxu0 %v54
    %693 = vmatprep.subr.mxu0 0.0
    %694 = vmatpush1.msra.mxu0 %v55
    %695 = vmatprep.subr.mxu0 0.0
    %696 = vmatpush1.msra.mxu0 0.0
    %697 = vmatprep.subr.mxu0 0.0
    %698 = vmatpush1.msra.mxu0 0.0
    %699 = vmatprep.subr.mxu0 0.0
    %700 = vmatpush1.msra.mxu0 0.0
    %701 = vmatprep.subr.mxu0 0.0
    %702 = vmatpush1.msra.mxu0 0.0
    %703 = vmatprep.subr.mxu0 0.0
    %704 = vmatpush1.msra.mxu0 0.0
    %705 = vmatprep.subr.mxu0 0.0
    %706 = vmatpush1.msra.mxu0 0.0
    %707 = vmatprep.subr.mxu0 0.0
    %708 = vmatpush1.msra.mxu0 0.0
    %709 = vmatprep.subr.mxu0 0.0
    %710 = vmatpush1.msra.mxu0 0.0
    %711 = vmatprep.subr.mxu0 0.0
    %712 = vmatpush1.msra.mxu0 0.0
    %713 = vmatprep.subr.mxu0 0.0
    %714 = vmatpush1.msra.mxu0 0.0
    %715 = vmatprep.subr.mxu0 0.0
    %716 = vmatpush1.msra.mxu0 0.0
    %717 = vmatprep.subr.mxu0 0.0
    %718 = vmatpush1.msra.mxu0 0.0
    %719 = vmatprep.subr.mxu0 0.0
    %720 = vmatpush1.msra.mxu0 0.0
    %721 = vmatprep.subr.mxu0 0.0
    %722 = vmatpush1.msra.mxu0 0.0
    %723 = vmatprep.subr.mxu0 0.0
    %724 = vmatpush1.msra.mxu0 0.0
    %725 = vmatprep.subr.mxu0 0.0
    %726 = vmatpush1.msra.mxu0 0.0
    %727 = vmatprep.subr.mxu0 0.0
    %728 = vmatpush1.msra.mxu0 0.0
    %729 = vmatprep.subr.mxu0 0.0
    %730 = vmatpush1.msra.mxu0 0.0
    %731 = vmatprep.subr.mxu0 0.0
    %732 = vmatpush1.msra.mxu0 0.0
    %733 = vmatprep.subr.mxu0 0.0
    %734 = vmatpush1.msra.mxu0 0.0
    %735 = vmatprep.subr.mxu0 0.0
    %736 = vmatpush1.msra.mxu0 0.0
    %737 = vmatprep.subr.mxu0 0.0
    %738 = vmatpush1.msra.mxu0 0.0
    %739 = vmatprep.subr.mxu0 0.0
    %740 = vmatpush1.msra.mxu0 0.0
    %741 = vmatprep.subr.mxu0 0.0
    %742 = vmatpush1.msra.mxu0 0.0
    %743 = vmatprep.mubr.f32.mxu0 0.0
    %744 = vmatmul.mubr.f32.gmra.mrb[0].mxu0 %v674
    %v745 = vpop.f32.mrb[0].mxu0
    %v746 = vadd.f32 %v671, %v745
    %v747 = vpop.f32.mrb[0].mxu0
    %748 = vmatprep.mubr.f32.mxu0 0.0
    %749 = vmatmul.mubr.f32.gmra.mrb[0].mxu0 %v677
    %v750 = vpop.f32.mrb[0].mxu0
    %v751 = vadd.f32 %v671, %v750
    %v752 = vpop.f32.mrb[0].mxu0
    %753 = vdwg.mxu0
    %v754 = vadd.f32 %v533, %v746
    %v755 = vadd.f32 %v534, %v751
    %756 = vst.msk [vmem:[#allocation7] sm:$0xff] %vm65, %v754
    %757 = vst.msk [vmem:[#allocation7 + $0x8] sm:$0xff] %vm65, %v755
    // Predicated region
    $region18: #{tpu_custom_call.1} parent=1 // pred_check
      _
    $region19: #{tpu_custom_call.1} parent=1 // pred_check_branch
      %759 = sbr.rel (0) target = $region21
    $region20: #{tpu_custom_call.1} parent=1 // pred_region
      %s761 = ssub.s32 256, 256
      %762 = vsyncadd [#allocation4], %s761
      %s763 = sshll.u32 [#allocation7], 4
      %s764 = int_to_ptr.vmem [resolvable:$true] %s763
      %769 = dma.vmem_to_hbm [thread:$0]  %s764, 256, %s2, [#allocation4], 128, 128, 8
    $region21: #{tpu_custom_call.1} parent=1 // pred_fallthru
      _
    // Predicated region
    $region22: #{tpu_custom_call.1} parent=1 // pred_check
      _
    $region23: #{tpu_custom_call.1} parent=1 // pred_check_branch
      %771 = sbr.rel (0) target = $region25
    $region24: #{tpu_custom_call.1} parent=1 // pred_region
      %772 = dma.done [#allocation4], 256
    $region25: #{tpu_custom_call.1} parent=1 // pred_fallthru
      _
    %773 = vsyncpa [#allocation3], 1
    %774 = vsyncpa [#allocation6], 1
    %775 = vsyncpa [#allocation4], 1

</llo_original>
